<compile_context>
chip_gen: v6e
topology: v6e:2x2x1
jax: 0.10.0
libtpu: 0.0.40
codegen_flags: <defaults>
</compile_context>

<pallas_src>
import functools

import jax
import jax.numpy as jnp
from jax.experimental import pallas as pl
from jax.experimental.pallas import tpu as pltpu


def _round_up(x, m):
    return ((x + m - 1) // m) * m


def _cmam_kernel(xa_ref, xv_ref, wa_ref, wv_ref, w1a_ref, w1v_ref, w2_ref,
                 ba_ref, bv_ref, b1_ref, b2_ref, out_ref, res_ref, *, fold):
    """One batch tile of the CMAM forward.

    xa_ref:  (tb, IN_A)        audio inputs              (batch-tiled)
    xv_ref:  (tb, IN_V)        video inputs              (batch-tiled)
    wa_ref:  (IN_A, E_A)       audio encoder weight      (VMEM-resident)
    wv_ref:  (IN_V, E_V)       video encoder weight
    w1a_ref: (E_A, H)          assoc-net layer-1 weight, rows for audio embed
    w1v_ref: (E_V, H)          assoc-net layer-1 weight, rows for video embed
    w2_ref:  (H, OUT)          assoc-net layer-2 weight
    b*_ref:  (1, feat)         biases
    out_ref: (tb//8, 8*OUT) if fold else (tb, OUT)
    res_ref: (tb, OUT) f32     scratch used for the lane-dense fold
    """
    # Per-modality Linear encoders (f32 accumulation on the MXU).
    ea = jnp.dot(xa_ref[...], wa_ref[...],
                 preferred_element_type=jnp.float32) + ba_ref[...]
    ev = jnp.dot(xv_ref[...], wv_ref[...],
                 preferred_element_type=jnp.float32) + bv_ref[...]

    # concat fusion + assoc-net layer 1, without materializing the concat:
    #   concat([ea, ev], axis=1) @ W1 == ea @ W1[:E_A] + ev @ W1[E_A:]
    h = jnp.maximum(
        jnp.dot(ea, w1a_ref[...], preferred_element_type=jnp.float32)
        + jnp.dot(ev, w1v_ref[...], preferred_element_type=jnp.float32)
        + b1_ref[...],
        0.0)

    # Final Linear (BatchNorm / Dropout are Identity in this configuration).
    res = jnp.dot(h, w2_ref[...], preferred_element_type=jnp.float32) + b2_ref[...]

    if fold:
        # Lane-dense output: pack 8 consecutive result rows into one slab row
        # (slab[i, k*OUT:(k+1)*OUT] = res[8*i + k]).  Done via sublane-strided
        # loads from a small scratch ref + a lane concat, then one dense store.
        tb8 = out_ref.shape[0]
        res_ref[...] = res
        folded = jnp.concatenate(
            [res_ref[pl.ds(k, tb8, stride=8), :] for k in range(8)], axis=1)
        out_ref[...] = folded.astype(out_ref.dtype)
    else:
        out_ref[...] = res.astype(out_ref.dtype)


def cmam_forward(x_audio, x_video, params, *, block_b=2048, fold_output=True,
                 vmem_limit_bytes=None):
    """CMAM forward: two Linear encoders, concat fusion, AssociationNetwork."""
    wa, ba = params["enc_audio_w"], params["enc_audio_b"]
    wv, bv = params["enc_video_w"], params["enc_video_b"]
    w1, b1 = params["assoc_w1"], params["assoc_b1"]
    w2, b2 = params["assoc_w2"], params["assoc_b2"]

    in_a, emb_a = wa.shape
    in_v, emb_v = wv.shape
    assert w1.shape[0] == emb_a + emb_v
    hidden = w1.shape[1]
    out_dim = w2.shape[1]
    B = x_audio.shape[0]
    assert x_video.shape[0] == B

    # Split W1 by input rows so the fusion concat never materializes.
    w1a = w1[:emb_a, :]
    w1v = w1[emb_a:, :]
    ba2 = ba.reshape(1, emb_a)
    bv2 = bv.reshape(1, emb_v)
    b12 = b1.reshape(1, hidden)
    b22 = b2.reshape(1, out_dim)

    # ---- batch tile selection -------------------------------------------------
    # Big tiles amortize the ~0.35us/grid-step overhead; cap so there are >=2
    # grid steps (both v7x TensorCores busy) and ~8 steps when the batch allows.
    block_b = _round_up(max(8, int(block_b)), 8)
    tb = min(block_b, max(512, _round_up(pl.cdiv(B, 8), 8)))
    tb = min(tb, _round_up(pl.cdiv(B, 2), 8))
    tb = max(8, min(tb, _round_up(B, 8)))
    if fold_output:
        if tb >= B:
            tb = _round_up(B, 8)            # single block == full folded array
        else:
            tb = _round_up(tb, 64)          # folded out block needs (tb//8) % 8 == 0
            if tb >= B:
                tb = _round_up(B, 8)

    grid = (pl.cdiv(B, tb),)
    batch_map = lambda i: (i, 0)            # activations / output: tiled on batch
    const_map = lambda i: (0, 0)            # weights / biases: VMEM-resident

    in_specs = [
        pl.BlockSpec((tb, in_a), batch_map),
        pl.BlockSpec((tb, in_v), batch_map),
        pl.BlockSpec((in_a, emb_a), const_map),
        pl.BlockSpec((in_v, emb_v), const_map),
        pl.BlockSpec((emb_a, hidden), const_map),
        pl.BlockSpec((emb_v, hidden), const_map),
        pl.BlockSpec((hidden, out_dim), const_map),
        pl.BlockSpec((1, emb_a), const_map),
        pl.BlockSpec((1, emb_v), const_map),
        pl.BlockSpec((1, hidden), const_map),
        pl.BlockSpec((1, out_dim), const_map),
    ]

    if fold_output:
        n_slab = pl.cdiv(B, 8)
        out_shape = jax.ShapeDtypeStruct((n_slab, 8 * out_dim), jnp.float32)
        out_spec = pl.BlockSpec((tb // 8, 8 * out_dim), batch_map)
    else:
        out_shape = jax.ShapeDtypeStruct((B, out_dim), jnp.float32)
        out_spec = pl.BlockSpec((tb, out_dim), batch_map)

    kernel = functools.partial(_cmam_kernel, fold=fold_output)

    out = pl.pallas_call(
        kernel,
        out_shape=out_shape,
        grid_spec=pltpu.PrefetchScalarGridSpec(
            num_scalar_prefetch=0,
            grid=grid,
            in_specs=in_specs,
            out_specs=out_spec,
            scratch_shapes=[pltpu.VMEM((tb, out_dim), jnp.float32)],
        ),
        compiler_params=pltpu.CompilerParams(
            dimension_semantics=("parallel",),
            vmem_limit_bytes=vmem_limit_bytes),
    )(x_audio, x_video, wa, wv, w1a, w1v, w2, ba2, bv2, b12, b22)

    if fold_output:
        out = out.reshape(-1, out_dim)[:B]   # free row-major un-fold + trim
    return out


def cmam_reference(x_audio, x_video, params):
    """Pure-JAX reference mirroring the PyTorch forward (concat fusion)."""
    e_a = x_audio @ params["enc_audio_w"] + params["enc_audio_b"]
    e_v = x_video @ params["enc_video_w"] + params["enc_video_b"]
    z = jnp.concatenate([e_a, e_v], axis=1)
    h = jnp.maximum(z @ params["assoc_w1"] + params["assoc_b1"], 0.0)
    return h @ params["assoc_w2"] + params["assoc_b2"]


if __name__ == "__main__":
    # Small, forward-consistent shapes.
    IN_A = 16        # audio feature dim
    IN_V = 24        # video feature dim
    EMB = 32         # per-modality embedding dim (encoder output)
    HIDDEN = 32      # AssociationNetwork hidden_size
    OUT = 16         # AssociationNetwork output_size

    key = jax.random.PRNGKey(0)
    keys = jax.random.split(key, 14)

    def init_linear(kw, kb, fan_in, fan_out):
        bound = 1.0 / jnp.sqrt(fan_in)
        w = jax.random.uniform(kw, (fan_in, fan_out), jnp.float32, -bound, bound)
        b = jax.random.uniform(kb, (fan_out,), jnp.float32, -bound, bound)
        return w, b

    wa, ba = init_linear(keys[2], keys[3], IN_A, EMB)
    wv, bv = init_linear(keys[4], keys[5], IN_V, EMB)
    w1, b1 = init_linear(keys[6], keys[7], 2 * EMB, HIDDEN)
    w2, b2 = init_linear(keys[8], keys[9], HIDDEN, OUT)
    params = dict(enc_audio_w=wa, enc_audio_b=ba,
                  enc_video_w=wv, enc_video_b=bv,
                  assoc_w1=w1, assoc_b1=b1,
                  assoc_w2=w2, assoc_b2=b2)

    # --- test 1: tiny batch, single block, folded output ------------------------
    B1 = 8
    xa1 = jax.random.normal(keys[0], (B1, IN_A), dtype=jnp.float32)
    xv1 = jax.random.normal(keys[1], (B1, IN_V), dtype=jnp.float32)
    out1 = jax.block_until_ready(cmam_forward(xa1, xv1, params))
    ref1 = cmam_reference(xa1, xv1, params)
    assert out1.shape == (B1, OUT)
    assert jnp.allclose(out1, ref1, atol=1e-5, rtol=1e-5), "single-block mismatch"

    # --- test 2: multi-step grid with a partial trailing block, folded output ---
    B2 = 200
    xa2 = jax.random.normal(keys[10], (B2, IN_A), dtype=jnp.float32)
    xv2 = jax.random.normal(keys[11], (B2, IN_V), dtype=jnp.float32)
    ref2 = cmam_reference(xa2, xv2, params)
    out2 = jax.block_until_ready(cmam_forward(xa2, xv2, params, block_b=64))
    assert out2.shape == (B2, OUT)
    assert jnp.allclose(out2, ref2, atol=1e-5, rtol=1e-5), "tiled folded mismatch"

    # --- test 3: same batch with the un-folded output path ----------------------
    out3 = jax.block_until_ready(
        cmam_forward(xa2, xv2, params, block_b=64, fold_output=False))
    assert out3.shape == (B2, OUT)
    assert jnp.allclose(out3, ref2, atol=1e-5, rtol=1e-5), "tiled unfolded mismatch"

    # --- test 4: default tile heuristic on the larger batch ---------------------
    out4 = jax.block_until_ready(cmam_forward(xa2, xv2, params))
    assert jnp.allclose(out4, ref2, atol=1e-5, rtol=1e-5), "default-tile mismatch"

    print("KERNEL_OK")
</pallas_src>

<mosaic_0001>
module attributes {stable_mosaic.version = 11 : i64} {
  func.func @_cmam_kernel(%arg0: i32, %arg1: memref<8x16xf32, #tpu.memory_space<vmem>>, %arg2: memref<8x24xf32, #tpu.memory_space<vmem>>, %arg3: memref<16x32xf32, #tpu.memory_space<vmem>>, %arg4: memref<24x32xf32, #tpu.memory_space<vmem>>, %arg5: memref<32x32xf32, #tpu.memory_space<vmem>>, %arg6: memref<32x32xf32, #tpu.memory_space<vmem>>, %arg7: memref<32x16xf32, #tpu.memory_space<vmem>>, %arg8: memref<1x32xf32, #tpu.memory_space<vmem>>, %arg9: memref<1x32xf32, #tpu.memory_space<vmem>>, %arg10: memref<1x32xf32, #tpu.memory_space<vmem>>, %arg11: memref<1x16xf32, #tpu.memory_space<vmem>>, %arg12: memref<1x128xf32, #tpu.memory_space<vmem>>, %arg13: memref<8x16xf32, #tpu.memory_space<vmem>>) attributes {dimension_semantics = [#tpu.dimension_semantics<parallel>], iteration_bounds = array<i64: 1>, scalar_prefetch = 0 : i64, scratch_operands = 1 : i64, tpu.core_type = #tpu.core_type<tc>, window_params = [{transform_indices = @transform_0, window_bounds = array<i64: 8, 16>}, {transform_indices = @transform_1, window_bounds = array<i64: 8, 24>}, {pipeline_mode = #tpu.pipeline_mode<synchronous>, transform_indices = @transform_2, window_bounds = array<i64: 16, 32>}, {pipeline_mode = #tpu.pipeline_mode<synchronous>, transform_indices = @transform_3, window_bounds = array<i64: 24, 32>}, {pipeline_mode = #tpu.pipeline_mode<synchronous>, transform_indices = @transform_4, window_bounds = array<i64: 32, 32>}, {pipeline_mode = #tpu.pipeline_mode<synchronous>, transform_indices = @transform_5, window_bounds = array<i64: 32, 32>}, {pipeline_mode = #tpu.pipeline_mode<synchronous>, transform_indices = @transform_6, window_bounds = array<i64: 32, 16>}, {pipeline_mode = #tpu.pipeline_mode<synchronous>, transform_indices = @transform_7, window_bounds = array<i64: 1, 32>}, {pipeline_mode = #tpu.pipeline_mode<synchronous>, transform_indices = @transform_8, window_bounds = array<i64: 1, 32>}, {pipeline_mode = #tpu.pipeline_mode<synchronous>, transform_indices = @transform_9, window_bounds = array<i64: 1, 32>}, {pipeline_mode = #tpu.pipeline_mode<synchronous>, transform_indices = @transform_10, window_bounds = array<i64: 1, 16>}, {transform_indices = @transform_11, window_bounds = array<i64: 1, 128>}]} {
    %c0 = arith.constant 0 : index
    %c0_0 = arith.constant 0 : index
    %0 = vector.load %arg1[%c0, %c0_0] : memref<8x16xf32, #tpu.memory_space<vmem>>, vector<8x16xf32>
    %c0_1 = arith.constant 0 : index
    %c0_2 = arith.constant 0 : index
    %1 = vector.load %arg3[%c0_1, %c0_2] : memref<16x32xf32, #tpu.memory_space<vmem>>, vector<16x32xf32>
    %cst = arith.constant dense<0.000000e+00> : vector<8x32xf32>
    %2 = tpu.matmul %0, %1, %cst {dimension_numbers = #tpu.dot_dimension_numbers<[1], [0], [0], [1], [0, 0, 1, 1], [], []>} : vector<8x16xf32>, vector<16x32xf32>, vector<8x32xf32> -> vector<8x32xf32>
    %c0_3 = arith.constant 0 : index
    %c0_4 = arith.constant 0 : index
    %3 = vector.load %arg8[%c0_3, %c0_4] : memref<1x32xf32, #tpu.memory_space<vmem>>, vector<1x32xf32>
    %4 = vector.broadcast %3 : vector<1x32xf32> to vector<8x32xf32>
    %5 = arith.addf %2, %4 : vector<8x32xf32>
    %c0_5 = arith.constant 0 : index
    %c0_6 = arith.constant 0 : index
    %6 = vector.load %arg2[%c0_5, %c0_6] : memref<8x24xf32, #tpu.memory_space<vmem>>, vector<8x24xf32>
    %c0_7 = arith.constant 0 : index
    %c0_8 = arith.constant 0 : index
    %7 = vector.load %arg4[%c0_7, %c0_8] : memref<24x32xf32, #tpu.memory_space<vmem>>, vector<24x32xf32>
    %cst_9 = arith.constant dense<0.000000e+00> : vector<8x32xf32>
    %8 = tpu.matmul %6, %7, %cst_9 {dimension_numbers = #tpu.dot_dimension_numbers<[1], [0], [0], [1], [0, 0, 1, 1], [], []>} : vector<8x24xf32>, vector<24x32xf32>, vector<8x32xf32> -> vector<8x32xf32>
    %c0_10 = arith.constant 0 : index
    %c0_11 = arith.constant 0 : index
    %9 = vector.load %arg9[%c0_10, %c0_11] : memref<1x32xf32, #tpu.memory_space<vmem>>, vector<1x32xf32>
    %10 = vector.broadcast %9 : vector<1x32xf32> to vector<8x32xf32>
    %11 = arith.addf %8, %10 : vector<8x32xf32>
    %c0_12 = arith.constant 0 : index
    %c0_13 = arith.constant 0 : index
    %12 = vector.load %arg5[%c0_12, %c0_13] : memref<32x32xf32, #tpu.memory_space<vmem>>, vector<32x32xf32>
    %cst_14 = arith.constant dense<0.000000e+00> : vector<8x32xf32>
    %13 = tpu.matmul %5, %12, %cst_14 {dimension_numbers = #tpu.dot_dimension_numbers<[1], [0], [0], [1], [0, 0, 1, 1], [], []>} : vector<8x32xf32>, vector<32x32xf32>, vector<8x32xf32> -> vector<8x32xf32>
    %c0_15 = arith.constant 0 : index
    %c0_16 = arith.constant 0 : index
    %14 = vector.load %arg6[%c0_15, %c0_16] : memref<32x32xf32, #tpu.memory_space<vmem>>, vector<32x32xf32>
    %cst_17 = arith.constant dense<0.000000e+00> : vector<8x32xf32>
    %15 = tpu.matmul %11, %14, %cst_17 {dimension_numbers = #tpu.dot_dimension_numbers<[1], [0], [0], [1], [0, 0, 1, 1], [], []>} : vector<8x32xf32>, vector<32x32xf32>, vector<8x32xf32> -> vector<8x32xf32>
    %16 = arith.addf %13, %15 : vector<8x32xf32>
    %c0_18 = arith.constant 0 : index
    %c0_19 = arith.constant 0 : index
    %17 = vector.load %arg10[%c0_18, %c0_19] : memref<1x32xf32, #tpu.memory_space<vmem>>, vector<1x32xf32>
    %18 = vector.broadcast %17 : vector<1x32xf32> to vector<8x32xf32>
    %19 = arith.addf %16, %18 : vector<8x32xf32>
    %cst_20 = arith.constant 0.000000e+00 : f32
    %20 = vector.broadcast %cst_20 : f32 to vector<8x32xf32>
    %21 = arith.maximumf %19, %20 : vector<8x32xf32>
    %c0_21 = arith.constant 0 : index
    %c0_22 = arith.constant 0 : index
    %22 = vector.load %arg7[%c0_21, %c0_22] : memref<32x16xf32, #tpu.memory_space<vmem>>, vector<32x16xf32>
    %cst_23 = arith.constant dense<0.000000e+00> : vector<8x16xf32>
    %23 = tpu.matmul %21, %22, %cst_23 {dimension_numbers = #tpu.dot_dimension_numbers<[1], [0], [0], [1], [0, 0, 1, 1], [], []>} : vector<8x32xf32>, vector<32x16xf32>, vector<8x16xf32> -> vector<8x16xf32>
    %c0_24 = arith.constant 0 : index
    %c0_25 = arith.constant 0 : index
    %24 = vector.load %arg11[%c0_24, %c0_25] : memref<1x16xf32, #tpu.memory_space<vmem>>, vector<1x16xf32>
    %25 = vector.broadcast %24 : vector<1x16xf32> to vector<8x16xf32>
    %26 = arith.addf %23, %25 : vector<8x16xf32>
    %c0_26 = arith.constant 0 : index
    %c0_27 = arith.constant 0 : index
    %27 = vector.load %arg13[%c0_26, %c0_27] : memref<8x16xf32, #tpu.memory_space<vmem>>, vector<8x16xf32>
    tpu.vector_store %arg13[%c0_26, %c0_27], %26 {strides = array<i32>} : memref<8x16xf32, #tpu.memory_space<vmem>>, vector<8x16xf32>,
    %c0_28 = arith.constant 0 : index
    %c0_29 = arith.constant 0 : index
    %28 = tpu.strided_load %arg13[%c0_28, %c0_29] {strides = array<i32: 8, 1>} : memref<8x16xf32, #tpu.memory_space<vmem>>, vector<1x16xf32>
    %c1 = arith.constant 1 : index
    %c0_30 = arith.constant 0 : index
    %29 = tpu.strided_load %arg13[%c1, %c0_30] {strides = array<i32: 8, 1>} : memref<8x16xf32, #tpu.memory_space<vmem>>, vector<1x16xf32>
    %c2 = arith.constant 2 : index
    %c0_31 = arith.constant 0 : index
    %30 = tpu.strided_load %arg13[%c2, %c0_31] {strides = array<i32: 8, 1>} : memref<8x16xf32, #tpu.memory_space<vmem>>, vector<1x16xf32>
    %c3 = arith.constant 3 : index
    %c0_32 = arith.constant 0 : index
    %31 = tpu.strided_load %arg13[%c3, %c0_32] {strides = array<i32: 8, 1>} : memref<8x16xf32, #tpu.memory_space<vmem>>, vector<1x16xf32>
    %c4 = arith.constant 4 : index
    %c0_33 = arith.constant 0 : index
    %32 = tpu.strided_load %arg13[%c4, %c0_33] {strides = array<i32: 8, 1>} : memref<8x16xf32, #tpu.memory_space<vmem>>, vector<1x16xf32>
    %c5 = arith.constant 5 : index
    %c0_34 = arith.constant 0 : index
    %33 = tpu.strided_load %arg13[%c5, %c0_34] {strides = array<i32: 8, 1>} : memref<8x16xf32, #tpu.memory_space<vmem>>, vector<1x16xf32>
    %c6 = arith.constant 6 : index
    %c0_35 = arith.constant 0 : index
    %34 = tpu.strided_load %arg13[%c6, %c0_35] {strides = array<i32: 8, 1>} : memref<8x16xf32, #tpu.memory_space<vmem>>, vector<1x16xf32>
    %c7 = arith.constant 7 : index
    %c0_36 = arith.constant 0 : index
    %35 = tpu.strided_load %arg13[%c7, %c0_36] {strides = array<i32: 8, 1>} : memref<8x16xf32, #tpu.memory_space<vmem>>, vector<1x16xf32>
    %36 = tpu.concatenate %28, %29, %30, %31, %32, %33, %34, %35 in 1 : vector<1x16xf32>, vector<1x16xf32>, vector<1x16xf32>, vector<1x16xf32>, vector<1x16xf32>, vector<1x16xf32>, vector<1x16xf32>, vector<1x16xf32> -> vector<1x128xf32>
    %c0_37 = arith.constant 0 : index
    %c0_38 = arith.constant 0 : index
    %37 = vector.load %arg12[%c0_37, %c0_38] : memref<1x128xf32, #tpu.memory_space<vmem>>, vector<1x128xf32>
    tpu.vector_store %arg12[%c0_37, %c0_38], %36 {strides = array<i32>} : memref<1x128xf32, #tpu.memory_space<vmem>>, vector<1x128xf32>,
    return
  }
  func.func @transform_0(%arg0: i32) -> (i32, i32) {
    %c0_i32 = arith.constant 0 : i32
    %c0_i32_0 = arith.constant 0 : i32
    return %arg0, %c0_i32 : i32, i32
  }
  func.func @transform_1(%arg0: i32) -> (i32, i32) {
    %c0_i32 = arith.constant 0 : i32
    %c0_i32_0 = arith.constant 0 : i32
    return %arg0, %c0_i32 : i32, i32
  }
  func.func @transform_2(%arg0: i32) -> (i32, i32) {
    %c0_i32 = arith.constant 0 : i32
    %c0_i32_0 = arith.constant 0 : i32
    %c0_i32_1 = arith.constant 0 : i32
    return %c0_i32, %c0_i32_0 : i32, i32
  }
  func.func @transform_3(%arg0: i32) -> (i32, i32) {
    %c0_i32 = arith.constant 0 : i32
    %c0_i32_0 = arith.constant 0 : i32
    %c0_i32_1 = arith.constant 0 : i32
    return %c0_i32, %c0_i32_0 : i32, i32
  }
  func.func @transform_4(%arg0: i32) -> (i32, i32) {
    %c0_i32 = arith.constant 0 : i32
    %c0_i32_0 = arith.constant 0 : i32
    %c0_i32_1 = arith.constant 0 : i32
    return %c0_i32, %c0_i32_0 : i32, i32
  }
  func.func @transform_5(%arg0: i32) -> (i32, i32) {
    %c0_i32 = arith.constant 0 : i32
    %c0_i32_0 = arith.constant 0 : i32
    %c0_i32_1 = arith.constant 0 : i32
    return %c0_i32, %c0_i32_0 : i32, i32
  }
  func.func @transform_6(%arg0: i32) -> (i32, i32) {
    %c0_i32 = arith.constant 0 : i32
    %c0_i32_0 = arith.constant 0 : i32
    %c0_i32_1 = arith.constant 0 : i32
    return %c0_i32, %c0_i32_0 : i32, i32
  }
  func.func @transform_7(%arg0: i32) -> (i32, i32) {
    %c0_i32 = arith.constant 0 : i32
    %c0_i32_0 = arith.constant 0 : i32
    %c0_i32_1 = arith.constant 0 : i32
    return %c0_i32, %c0_i32_0 : i32, i32
  }
  func.func @transform_8(%arg0: i32) -> (i32, i32) {
    %c0_i32 = arith.constant 0 : i32
    %c0_i32_0 = arith.constant 0 : i32
    %c0_i32_1 = arith.constant 0 : i32
    return %c0_i32, %c0_i32_0 : i32, i32
  }
  func.func @transform_9(%arg0: i32) -> (i32, i32) {
    %c0_i32 = arith.constant 0 : i32
    %c0_i32_0 = arith.constant 0 : i32
    %c0_i32_1 = arith.constant 0 : i32
    return %c0_i32, %c0_i32_0 : i32, i32
  }
  func.func @transform_10(%arg0: i32) -> (i32, i32) {
    %c0_i32 = arith.constant 0 : i32
    %c0_i32_0 = arith.constant 0 : i32
    %c0_i32_1 = arith.constant 0 : i32
    return %c0_i32, %c0_i32_0 : i32, i32
  }
  func.func @transform_11(%arg0: i32) -> (i32, i32) {
    %c0_i32 = arith.constant 0 : i32
    %c0_i32_0 = arith.constant 0 : i32
    return %arg0, %c0_i32 : i32, i32
  }
}

</mosaic_0001>

<llo_original>
// kernel: tpu_custom_call.1
$region0: #{tpu_custom_call.1}
  #allocation0 [shape = 'u32[]', space=smem, size = 0x4, offset = 0x4, fixed_abs, tag = 'smem constant byte address 0x4 - core index']
  #allocation1 [shape = 'u32[144,128]{1,0:T(1,128)}', space=vmem, size = 0x12000, scoped, tag = 'internal scratch']
  #allocation2 [shape = 'f32[8,16]{1,0:T(8,128)}', space=vmem, size = 0x1000, scoped, tag = 'scratch operand']
  %s0 = inlined_call_operand.hbm [shape: f32[8,16], index: 0, kind: input, shape index: {}]
  %s1 = inlined_call_operand.hbm [shape: f32[8,24], index: 1, kind: input, shape index: {}]
  %s2 = inlined_call_operand.vmem [shape: f32[16,32], index: 2, kind: input, shape index: {}]
  %s3 = inlined_call_operand.hbm [shape: f32[24,32], index: 3, kind: input, shape index: {}]
  %s4 = inlined_call_operand.vmem [shape: f32[32,32], index: 4, kind: input, shape index: {}]
  %s5 = inlined_call_operand.hbm [shape: f32[32,32], index: 5, kind: input, shape index: {}]
  %s6 = inlined_call_operand.vmem [shape: f32[32,16], index: 6, kind: input, shape index: {}]
  %s7 = inlined_call_operand.vmem [shape: f32[1,32], index: 7, kind: input, shape index: {}]
  %s8 = inlined_call_operand.vmem [shape: f32[1,32], index: 8, kind: input, shape index: {}]
  %s9 = inlined_call_operand.vmem [shape: f32[1,32], index: 9, kind: input, shape index: {}]
  %s10 = inlined_call_operand.vmem [shape: f32[1,16], index: 10, kind: input, shape index: {}]
  %s11 = inlined_call_operand.hbm [shape: f32[1,128], index: 11, kind: output, shape index: {}]
  %s12 = sld [smem:[#allocation0]]
  $region70: #{tpu_custom_call.1} parent=0
    _
  %s14 = ssub.s32 1, %s12
  %s15 = scalar_select 0, %s14, %s12
  $region1: #{tpu_custom_call.1} parent=0
    #allocation3 [shape = 'u8[4096]{0}', space=vmem, size = 0x1000, scoped, tag = 'input window, operand 0, single buffered']
    #allocation4 [shape = 's32[1]{0}', space=sflag, size = 0x4, scoped, tag = 'scoped memory for tpu_custom_call.1']
    #allocation5 [shape = 's32[1]{0}', space=sflag, size = 0x4, scoped, tag = 'scoped memory for tpu_custom_call.1']
    #allocation6 [shape = 'u8[4096]{0}', space=vmem, size = 0x1000, scoped, tag = 'input window, operand 1, single buffered']
    #allocation7 [shape = 's32[1]{0}', space=sflag, size = 0x4, scoped, tag = 'scoped memory for tpu_custom_call.1']
    #allocation8 [shape = 'u8[12288]{0}', space=vmem, size = 0x3000, scoped, tag = 'input window, operand 3, single buffered']
    #allocation9 [shape = 'u8[16384]{0}', space=vmem, size = 0x4000, scoped, tag = 'input window, operand 5, single buffered']
    #allocation10 [shape = 's32[1]{0}', space=sflag, size = 0x4, scoped, tag = 'scoped memory for tpu_custom_call.1']
    #allocation11 [shape = 'u8[512]{0}', space=vmem, size = 0x400, scoped, tag = 'output window, operand 0, single buffered']
    %16 = vsyncpa [#allocation4], 0
    %17 = vsyncpa [#allocation7], 0
    %18 = vsyncpa [#allocation10], 0
    %19 = vsyncpa [#allocation5], 0
    // Predicated region
    $region2: #{tpu_custom_call.1} parent=1 // pred_check
      _
    $region3: #{tpu_custom_call.1} parent=1 // pred_check_branch
      %21 = sbr.rel (0) target = $region5
    $region4: #{tpu_custom_call.1} parent=1 // pred_region
      %s23 = ssub.s32 128, 128
      %24 = vsyncadd [#allocation4], %s23
      %s26 = sshll.u32 [#allocation3], 4
      %s27 = int_to_ptr.vmem [resolvable:$true] %s26
      %29 = dma.hbm_to_vmem [thread:$0]  %s0, 128, %s27, [#allocation4]
    $region5: #{tpu_custom_call.1} parent=1 // pred_fallthru
      _
    // Predicated region
    $region6: #{tpu_custom_call.1} parent=1 // pred_check
      _
    $region7: #{tpu_custom_call.1} parent=1 // pred_check_branch
      %31 = sbr.rel (0) target = $region9
    $region8: #{tpu_custom_call.1} parent=1 // pred_region
      %s33 = ssub.s32 128, 128
      %34 = vsyncadd [#allocation7], %s33
      %s36 = sshll.u32 [#allocation6], 4
      %s37 = int_to_ptr.vmem [resolvable:$true] %s36
      %39 = dma.hbm_to_vmem [thread:$0]  %s1, 128, %s37, [#allocation7]
    $region9: #{tpu_custom_call.1} parent=1 // pred_fallthru
      _
    // Predicated region
    $region10: #{tpu_custom_call.1} parent=1 // pred_check
      _
    $region11: #{tpu_custom_call.1} parent=1 // pred_check_branch
      %41 = sbr.rel (0) target = $region13
    $region12: #{tpu_custom_call.1} parent=1 // pred_region
      _
    $region13: #{tpu_custom_call.1} parent=1 // pred_fallthru
      _
    // Predicated region
    $region14: #{tpu_custom_call.1} parent=1 // pred_check
      _
    $region15: #{tpu_custom_call.1} parent=1 // pred_check_branch
      %43 = sbr.rel (0) target = $region17
    $region16: #{tpu_custom_call.1} parent=1 // pred_region
      %s45 = ssub.s32 384, 384
      %46 = vsyncadd [#allocation7], %s45
      %s47 = sshll.u32 [#allocation8], 4
      %s48 = int_to_ptr.vmem [resolvable:$true] %s47
      %53 = dma.hbm_to_vmem [thread:$0]  %s3, 384, %s48, [#allocation7], 128, 128, 8
    $region17: #{tpu_custom_call.1} parent=1 // pred_fallthru
      _
    // Predicated region
    $region18: #{tpu_custom_call.1} parent=1 // pred_check
      _
    $region19: #{tpu_custom_call.1} parent=1 // pred_check_branch
      %55 = sbr.rel (0) target = $region21
    $region20: #{tpu_custom_call.1} parent=1 // pred_region
      _
    $region21: #{tpu_custom_call.1} parent=1 // pred_fallthru
      _
    // Predicated region
    $region22: #{tpu_custom_call.1} parent=1 // pred_check
      _
    $region23: #{tpu_custom_call.1} parent=1 // pred_check_branch
      %57 = sbr.rel (0) target = $region25
    $region24: #{tpu_custom_call.1} parent=1 // pred_region
      %s59 = ssub.s32 512, 512
      %60 = vsyncadd [#allocation10], %s59
      %s61 = sshll.u32 [#allocation9], 4
      %s62 = int_to_ptr.vmem [resolvable:$true] %s61
      %67 = dma.hbm_to_vmem [thread:$0]  %s5, 512, %s62, [#allocation10], 128, 128, 8
    $region25: #{tpu_custom_call.1} parent=1 // pred_fallthru
      _
    // Predicated region
    $region26: #{tpu_custom_call.1} parent=1 // pred_check
      _
    $region27: #{tpu_custom_call.1} parent=1 // pred_check_branch
      %69 = sbr.rel (0) target = $region29
    $region28: #{tpu_custom_call.1} parent=1 // pred_region
      _
    $region29: #{tpu_custom_call.1} parent=1 // pred_fallthru
      _
    // Predicated region
    $region30: #{tpu_custom_call.1} parent=1 // pred_check
      _
    $region31: #{tpu_custom_call.1} parent=1 // pred_check_branch
      %71 = sbr.rel (0) target = $region33
    $region32: #{tpu_custom_call.1} parent=1 // pred_region
      _
    $region33: #{tpu_custom_call.1} parent=1 // pred_fallthru
      _
    // Predicated region
    $region34: #{tpu_custom_call.1} parent=1 // pred_check
      _
    $region35: #{tpu_custom_call.1} parent=1 // pred_check_branch
      %73 = sbr.rel (0) target = $region37
    $region36: #{tpu_custom_call.1} parent=1 // pred_region
      _
    $region37: #{tpu_custom_call.1} parent=1 // pred_fallthru
      _
    // Predicated region
    $region38: #{tpu_custom_call.1} parent=1 // pred_check
      _
    $region39: #{tpu_custom_call.1} parent=1 // pred_check_branch
      %75 = sbr.rel (0) target = $region41
    $region40: #{tpu_custom_call.1} parent=1 // pred_region
      _
    $region41: #{tpu_custom_call.1} parent=1 // pred_fallthru
      _
    // Predicated region
    $region42: #{tpu_custom_call.1} parent=1 // pred_check
      _
    $region43: #{tpu_custom_call.1} parent=1 // pred_check_branch
      %77 = sbr.rel (0) target = $region45
    $region44: #{tpu_custom_call.1} parent=1 // pred_region
      _
    $region45: #{tpu_custom_call.1} parent=1 // pred_fallthru
      _
    // Predicated region
    $region46: #{tpu_custom_call.1} parent=1 // pred_check
      _
    $region47: #{tpu_custom_call.1} parent=1 // pred_check_branch
      %79 = sbr.rel (0) target = $region49
    $region48: #{tpu_custom_call.1} parent=1 // pred_region
      %80 = dma.done [#allocation4], 128
    $region49: #{tpu_custom_call.1} parent=1 // pred_fallthru
      _
    // Predicated region
    $region50: #{tpu_custom_call.1} parent=1 // pred_check
      _
    $region51: #{tpu_custom_call.1} parent=1 // pred_check_branch
      %82 = sbr.rel (0) target = $region53
    $region52: #{tpu_custom_call.1} parent=1 // pred_region
      %83 = dma.done [#allocation7], 128
    $region53: #{tpu_custom_call.1} parent=1 // pred_fallthru
      _
    // Predicated region
    $region54: #{tpu_custom_call.1} parent=1 // pred_check
      _
    $region55: #{tpu_custom_call.1} parent=1 // pred_check_branch
      %85 = sbr.rel (0) target = $region57
    $region56: #{tpu_custom_call.1} parent=1 // pred_region
      %86 = dma.done [#allocation7], 384
    $region57: #{tpu_custom_call.1} parent=1 // pred_fallthru
      _
    // Predicated region
    $region58: #{tpu_custom_call.1} parent=1 // pred_check
      _
    $region59: #{tpu_custom_call.1} parent=1 // pred_check_branch
      %88 = sbr.rel (0) target = $region61
    $region60: #{tpu_custom_call.1} parent=1 // pred_region
      %89 = dma.done [#allocation10], 512
    $region61: #{tpu_custom_call.1} parent=1 // pred_fallthru
      _
    %v90 = vld [vmem:[#allocation3] sm:$0xff]
    %v91 = vld [vmem:[%s2] sm:$0xff]
    %v92 = vld [vmem:[%s2 + $0x8] sm:$0xff]
    %v93 = vld [vmem:[%s7] sm:$0x1]
    %v95 = vlaneseq
    %v96 = vshrl.u32 %v95, 7
    %v97 = vsub.s32 0, %v96
    %v98 = vrot.slane %v93, %v97
    %vm100 = vcmask 130048
    %v102 = vsel %vm100, %v90, 0
    %104 = vmatprep.subr.mxu0 0.0
    %105 = vmatpush1.msra.mxu0 0.0
    %106 = vmatprep.subr.mxu0 0.0
    %107 = vmatpush1.msra.mxu0 0.0
    %108 = vmatprep.subr.mxu0 0.0
    %109 = vmatpush1.msra.mxu0 0.0
    %110 = vmatprep.subr.mxu0 0.0
    %111 = vmatpush1.msra.mxu0 0.0
    %112 = vmatprep.subr.mxu0 0.0
    %113 = vmatpush1.msra.mxu0 0.0
    %114 = vmatprep.subr.mxu0 0.0
    %115 = vmatpush1.msra.mxu0 0.0
    %116 = vmatprep.subr.mxu0 0.0
    %117 = vmatpush1.msra.mxu0 0.0
    %118 = vmatprep.subr.mxu0 0.0
    %119 = vmatpush1.msra.mxu0 0.0
    %120 = vmatprep.subr.mxu0 0.0
    %121 = vmatpush1.msra.mxu0 0.0
    %122 = vmatprep.subr.mxu0 0.0
    %123 = vmatpush1.msra.mxu0 0.0
    %124 = vmatprep.subr.mxu0 0.0
    %125 = vmatpush1.msra.mxu0 0.0
    %126 = vmatprep.subr.mxu0 0.0
    %127 = vmatpush1.msra.mxu0 0.0
    %128 = vmatprep.subr.mxu0 0.0
    %129 = vmatpush1.msra.mxu0 0.0
    %130 = vmatprep.subr.mxu0 0.0
    %131 = vmatpush1.msra.mxu0 0.0
    %132 = vmatprep.subr.mxu0 0.0
    %133 = vmatpush1.msra.mxu0 %v92
    %134 = vmatprep.subr.mxu0 0.0
    %135 = vmatpush1.msra.mxu0 %v91
    %136 = vmatprep.subr.mxu0 0.0
    %137 = vmatpush2.msra.mxu0 0.0
    %138 = vmatprep.subr.mxu0 0.0
    %139 = vmatpush2.msra.mxu0 0.0
    %140 = vmatprep.subr.mxu0 0.0
    %141 = vmatpush2.msra.mxu0 0.0
    %142 = vmatprep.subr.mxu0 0.0
    %143 = vmatpush2.msra.mxu0 0.0
    %144 = vmatprep.subr.mxu0 0.0
    %145 = vmatpush2.msra.mxu0 0.0
    %146 = vmatprep.subr.mxu0 0.0
    %147 = vmatpush2.msra.mxu0 0.0
    %148 = vmatprep.subr.mxu0 0.0
    %149 = vmatpush2.msra.mxu0 0.0
    %150 = vmatprep.subr.mxu0 0.0
    %151 = vmatpush2.msra.mxu0 0.0
    %152 = vmatprep.subr.mxu0 0.0
    %153 = vmatpush2.msra.mxu0 0.0
    %154 = vmatprep.subr.mxu0 0.0
    %155 = vmatpush2.msra.mxu0 0.0
    %156 = vmatprep.subr.mxu0 0.0
    %157 = vmatpush2.msra.mxu0 0.0
    %158 = vmatprep.subr.mxu0 0.0
    %159 = vmatpush2.msra.mxu0 0.0
    %160 = vmatprep.subr.mxu0 0.0
    %161 = vmatpush2.msra.mxu0 0.0
    %162 = vmatprep.subr.mxu0 0.0
    %163 = vmatpush2.msra.mxu0 0.0
    %164 = vmatprep.subr.mxu0 0.0
    %165 = vmatpush2.msra.mxu0 0.0
    %166 = vmatprep.subr.mxu0 0.0
    %167 = vmatpush2.msra.mxu0 0.0
    %168 = vmatprep.mubr.f32.mxu0 0.0
    %169 = vmatmul.mubr.f32.gmra.mxu0 %v102
    %v170 = vpop.f32.mrf.mxu0
    %v171 = vadd.f32 %v98, %v170
    %v172 = vpop.f32.mrf.mxu0
    %173 = vdwg.mxu0
    %v174 = vld [vmem:[#allocation6] sm:$0xff]
    %v175 = vld [vmem:[#allocation8] sm:$0xff]
    %v176 = vld [vmem:[#allocation8 + $0x8] sm:$0xff]
    %v177 = vld [vmem:[#allocation8 + $0x10] sm:$0xff]
    %v178 = vld [vmem:[%s8] sm:$0x1]
    %v180 = vlaneseq
    %v181 = vshrl.u32 %v180, 7
    %v182 = vsub.s32 0, %v181
    %v183 = vrot.slane %v178, %v182
    %vm185 = vcmask 195584
    %v187 = vsel %vm185, %v174, 0
    %189 = vmatprep.subr.mxu0 0.0
    %190 = vmatpush1.msra.mxu0 0.0
    %191 = vmatprep.subr.mxu0 0.0
    %192 = vmatpush1.msra.mxu0 0.0
    %193 = vmatprep.subr.mxu0 0.0
    %194 = vmatpush1.msra.mxu0 0.0
    %195 = vmatprep.subr.mxu0 0.0
    %196 = vmatpush1.msra.mxu0 0.0
    %197 = vmatprep.subr.mxu0 0.0
    %198 = vmatpush1.msra.mxu0 0.0
    %199 = vmatprep.subr.mxu0 0.0
    %200 = vmatpush1.msra.mxu0 0.0
    %201 = vmatprep.subr.mxu0 0.0
    %202 = vmatpush1.msra.mxu0 0.0
    %203 = vmatprep.subr.mxu0 0.0
    %204 = vmatpush1.msra.mxu0 0.0
    %205 = vmatprep.subr.mxu0 0.0
    %206 = vmatpush1.msra.mxu0 0.0
    %207 = vmatprep.subr.mxu0 0.0
    %208 = vmatpush1.msra.mxu0 0.0
    %209 = vmatprep.subr.mxu0 0.0
    %210 = vmatpush1.msra.mxu0 0.0
    %211 = vmatprep.subr.mxu0 0.0
    %212 = vmatpush1.msra.mxu0 0.0
    %213 = vmatprep.subr.mxu0 0.0
    %214 = vmatpush1.msra.mxu0 0.0
    %215 = vmatprep.subr.mxu0 0.0
    %216 = vmatpush1.msra.mxu0 %v177
    %217 = vmatprep.subr.mxu0 0.0
    %218 = vmatpush1.msra.mxu0 %v176
    %219 = vmatprep.subr.mxu0 0.0
    %220 = vmatpush1.msra.mxu0 %v175
    %221 = vmatprep.subr.mxu0 0.0
    %222 = vmatpush2.msra.mxu0 0.0
    %223 = vmatprep.subr.mxu0 0.0
    %224 = vmatpush2.msra.mxu0 0.0
    %225 = vmatprep.subr.mxu0 0.0
    %226 = vmatpush2.msra.mxu0 0.0
    %227 = vmatprep.subr.mxu0 0.0
    %228 = vmatpush2.msra.mxu0 0.0
    %229 = vmatprep.subr.mxu0 0.0
    %230 = vmatpush2.msra.mxu0 0.0
    %231 = vmatprep.subr.mxu0 0.0
    %232 = vmatpush2.msra.mxu0 0.0
    %233 = vmatprep.subr.mxu0 0.0
    %234 = vmatpush2.msra.mxu0 0.0
    %235 = vmatprep.subr.mxu0 0.0
    %236 = vmatpush2.msra.mxu0 0.0
    %237 = vmatprep.subr.mxu0 0.0
    %238 = vmatpush2.msra.mxu0 0.0
    %239 = vmatprep.subr.mxu0 0.0
    %240 = vmatpush2.msra.mxu0 0.0
    %241 = vmatprep.subr.mxu0 0.0
    %242 = vmatpush2.msra.mxu0 0.0
    %243 = vmatprep.subr.mxu0 0.0
    %244 = vmatpush2.msra.mxu0 0.0
    %245 = vmatprep.subr.mxu0 0.0
    %246 = vmatpush2.msra.mxu0 0.0
    %247 = vmatprep.subr.mxu0 0.0
    %248 = vmatpush2.msra.mxu0 0.0
    %249 = vmatprep.subr.mxu0 0.0
    %250 = vmatpush2.msra.mxu0 0.0
    %251 = vmatprep.subr.mxu0 0.0
    %252 = vmatpush2.msra.mxu0 0.0
    %253 = vmatprep.mubr.f32.mxu0 0.0
    %254 = vmatmul.mubr.f32.gmra.mxu0 %v187
    %v255 = vpop.f32.mrf.mxu0
    %v256 = vadd.f32 %v183, %v255
    %v257 = vpop.f32.mrf.mxu0
    %258 = vdwg.mxu0
    %v259 = vld [vmem:[%s4] sm:$0xff]
    %v260 = vld [vmem:[%s4 + $0x8] sm:$0xff]
    %v261 = vld [vmem:[%s4 + $0x10] sm:$0xff]
    %v262 = vld [vmem:[%s4 + $0x18] sm:$0xff]
    %v263 = vld [vmem:[#allocation9] sm:$0xff]
    %v264 = vld [vmem:[#allocation9 + $0x8] sm:$0xff]
    %v265 = vld [vmem:[#allocation9 + $0x10] sm:$0xff]
    %v266 = vld [vmem:[#allocation9 + $0x18] sm:$0xff]
    %vm267 = vcmask 261120
    %v269 = vsel %vm267, %v256, 0
    %271 = vmatprep.subr.mxu0 0.0
    %272 = vmatpush1.msra.mxu0 0.0
    %273 = vmatprep.subr.mxu0 0.0
    %274 = vmatpush1.msra.mxu0 0.0
    %275 = vmatprep.subr.mxu0 0.0
    %276 = vmatpush1.msra.mxu0 0.0
    %277 = vmatprep.subr.mxu0 0.0
    %278 = vmatpush1.msra.mxu0 0.0
    %279 = vmatprep.subr.mxu0 0.0
    %280 = vmatpush1.msra.mxu0 0.0
    %281 = vmatprep.subr.mxu0 0.0
    %282 = vmatpush1.msra.mxu0 0.0
    %283 = vmatprep.subr.mxu0 0.0
    %284 = vmatpush1.msra.mxu0 0.0
    %285 = vmatprep.subr.mxu0 0.0
    %286 = vmatpush1.msra.mxu0 0.0
    %287 = vmatprep.subr.mxu0 0.0
    %288 = vmatpush1.msra.mxu0 0.0
    %289 = vmatprep.subr.mxu0 0.0
    %290 = vmatpush1.msra.mxu0 0.0
    %291 = vmatprep.subr.mxu0 0.0
    %292 = vmatpush1.msra.mxu0 0.0
    %293 = vmatprep.subr.mxu0 0.0
    %294 = vmatpush1.msra.mxu0 0.0
    %295 = vmatprep.subr.mxu0 0.0
    %296 = vmatpush1.msra.mxu0 %v266
    %297 = vmatprep.subr.mxu0 0.0
    %298 = vmatpush1.msra.mxu0 %v265
    %299 = vmatprep.subr.mxu0 0.0
    %300 = vmatpush1.msra.mxu0 %v264
    %301 = vmatprep.subr.mxu0 0.0
    %302 = vmatpush1.msra.mxu0 %v263
    %303 = vmatprep.subr.mxu0 0.0
    %304 = vmatpush2.msra.mxu0 0.0
    %305 = vmatprep.subr.mxu0 0.0
    %306 = vmatpush2.msra.mxu0 0.0
    %307 = vmatprep.subr.mxu0 0.0
    %308 = vmatpush2.msra.mxu0 0.0
    %309 = vmatprep.subr.mxu0 0.0
    %310 = vmatpush2.msra.mxu0 0.0
    %311 = vmatprep.subr.mxu0 0.0
    %312 = vmatpush2.msra.mxu0 0.0
    %313 = vmatprep.subr.mxu0 0.0
    %314 = vmatpush2.msra.mxu0 0.0
    %315 = vmatprep.subr.mxu0 0.0
    %316 = vmatpush2.msra.mxu0 0.0
    %317 = vmatprep.subr.mxu0 0.0
    %318 = vmatpush2.msra.mxu0 0.0
    %319 = vmatprep.subr.mxu0 0.0
    %320 = vmatpush2.msra.mxu0 0.0
    %321 = vmatprep.subr.mxu0 0.0
    %322 = vmatpush2.msra.mxu0 0.0
    %323 = vmatprep.subr.mxu0 0.0
    %324 = vmatpush2.msra.mxu0 0.0
    %325 = vmatprep.subr.mxu0 0.0
    %326 = vmatpush2.msra.mxu0 0.0
    %327 = vmatprep.subr.mxu0 0.0
    %328 = vmatpush2.msra.mxu0 0.0
    %329 = vmatprep.subr.mxu0 0.0
    %330 = vmatpush2.msra.mxu0 0.0
    %331 = vmatprep.subr.mxu0 0.0
    %332 = vmatpush2.msra.mxu0 0.0
    %333 = vmatprep.subr.mxu0 0.0
    %334 = vmatpush2.msra.mxu0 0.0
    %335 = vmatprep.mubr.f32.mxu0 0.0
    %336 = vmatmul.mubr.f32.gmra.mxu0 %v269
    %v337 = vpop.f32.mrf.mxu0
    %v338 = vadd.f32 0.0, %v337
    %v339 = vpop.f32.mrf.mxu0
    %340 = vdwg.mxu0
    %v342 = vsel %vm267, %v171, 0
    %344 = vmatprep.subr.mxu0 0.0
    %345 = vmatpush1.msra.mxu0 0.0
    %346 = vmatprep.subr.mxu0 0.0
    %347 = vmatpush1.msra.mxu0 0.0
    %348 = vmatprep.subr.mxu0 0.0
    %349 = vmatpush1.msra.mxu0 0.0
    %350 = vmatprep.subr.mxu0 0.0
    %351 = vmatpush1.msra.mxu0 0.0
    %352 = vmatprep.subr.mxu0 0.0
    %353 = vmatpush1.msra.mxu0 0.0
    %354 = vmatprep.subr.mxu0 0.0
    %355 = vmatpush1.msra.mxu0 0.0
    %356 = vmatprep.subr.mxu0 0.0
    %357 = vmatpush1.msra.mxu0 0.0
    %358 = vmatprep.subr.mxu0 0.0
    %359 = vmatpush1.msra.mxu0 0.0
    %360 = vmatprep.subr.mxu0 0.0
    %361 = vmatpush1.msra.mxu0 0.0
    %362 = vmatprep.subr.mxu0 0.0
    %363 = vmatpush1.msra.mxu0 0.0
    %364 = vmatprep.subr.mxu0 0.0
    %365 = vmatpush1.msra.mxu0 0.0
    %366 = vmatprep.subr.mxu0 0.0
    %367 = vmatpush1.msra.mxu0 0.0
    %368 = vmatprep.subr.mxu0 0.0
    %369 = vmatpush1.msra.mxu0 %v262
    %370 = vmatprep.subr.mxu0 0.0
    %371 = vmatpush1.msra.mxu0 %v261
    %372 = vmatprep.subr.mxu0 0.0
    %373 = vmatpush1.msra.mxu0 %v260
    %374 = vmatprep.subr.mxu0 0.0
    %375 = vmatpush1.msra.mxu0 %v259
    %376 = vmatprep.subr.mxu0 0.0
    %377 = vmatpush2.msra.mxu0 0.0
    %378 = vmatprep.subr.mxu0 0.0
    %379 = vmatpush2.msra.mxu0 0.0
    %380 = vmatprep.subr.mxu0 0.0
    %381 = vmatpush2.msra.mxu0 0.0
    %382 = vmatprep.subr.mxu0 0.0
    %383 = vmatpush2.msra.mxu0 0.0
    %384 = vmatprep.subr.mxu0 0.0
    %385 = vmatpush2.msra.mxu0 0.0
    %386 = vmatprep.subr.mxu0 0.0
    %387 = vmatpush2.msra.mxu0 0.0
    %388 = vmatprep.subr.mxu0 0.0
    %389 = vmatpush2.msra.mxu0 0.0
    %390 = vmatprep.subr.mxu0 0.0
    %391 = vmatpush2.msra.mxu0 0.0
    %392 = vmatprep.subr.mxu0 0.0
    %393 = vmatpush2.msra.mxu0 0.0
    %394 = vmatprep.subr.mxu0 0.0
    %395 = vmatpush2.msra.mxu0 0.0
    %396 = vmatprep.subr.mxu0 0.0
    %397 = vmatpush2.msra.mxu0 0.0
    %398 = vmatprep.subr.mxu0 0.0
    %399 = vmatpush2.msra.mxu0 0.0
    %400 = vmatprep.subr.mxu0 0.0
    %401 = vmatpush2.msra.mxu0 0.0
    %402 = vmatprep.subr.mxu0 0.0
    %403 = vmatpush2.msra.mxu0 0.0
    %404 = vmatprep.subr.mxu0 0.0
    %405 = vmatpush2.msra.mxu0 0.0
    %406 = vmatprep.subr.mxu0 0.0
    %407 = vmatpush2.msra.mxu0 0.0
    %408 = vmatprep.mubr.f32.mxu0 0.0
    %409 = vmatmul.mubr.f32.gmra.mxu0 %v342
    %v410 = vpop.f32.mrf.mxu0
    %v411 = vadd.f32 %v338, %v410
    %v412 = vpop.f32.mrf.mxu0
    %413 = vdwg.mxu0
    %v414 = vld [vmem:[%s9] sm:$0x1]
    %v416 = vlaneseq
    %v417 = vshrl.u32 %v416, 7
    %v418 = vsub.s32 0, %v417
    %v419 = vrot.slane %v414, %v418
    %v421 = vadd.f32 %v411, %v419
    %v422 = vmax.f32 %v421, 0.0
    %v423 = vld [vmem:[%s6] sm:$0xff]
    %v424 = vld [vmem:[%s6 + $0x8] sm:$0xff]
    %v425 = vld [vmem:[%s6 + $0x10] sm:$0xff]
    %v426 = vld [vmem:[%s6 + $0x18] sm:$0xff]
    %v427 = vld [vmem:[%s10] sm:$0x1]
    %v429 = vlaneseq
    %v430 = vshrl.u32 %v429, 7
    %v431 = vsub.s32 0, %v430
    %v432 = vrot.slane %v427, %v431
    %v435 = vsel %vm267, %v422, 0
    %437 = vmatprep.subr.mxu0 0.0
    %438 = vmatpush1.msra.mxu0 0.0
    %439 = vmatprep.subr.mxu0 0.0
    %440 = vmatpush1.msra.mxu0 0.0
    %441 = vmatprep.subr.mxu0 0.0
    %442 = vmatpush1.msra.mxu0 0.0
    %443 = vmatprep.subr.mxu0 0.0
    %444 = vmatpush1.msra.mxu0 0.0
    %445 = vmatprep.subr.mxu0 0.0
    %446 = vmatpush1.msra.mxu0 0.0
    %447 = vmatprep.subr.mxu0 0.0
    %448 = vmatpush1.msra.mxu0 0.0
    %449 = vmatprep.subr.mxu0 0.0
    %450 = vmatpush1.msra.mxu0 0.0
    %451 = vmatprep.subr.mxu0 0.0
    %452 = vmatpush1.msra.mxu0 0.0
    %453 = vmatprep.subr.mxu0 0.0
    %454 = vmatpush1.msra.mxu0 0.0
    %455 = vmatprep.subr.mxu0 0.0
    %456 = vmatpush1.msra.mxu0 0.0
    %457 = vmatprep.subr.mxu0 0.0
    %458 = vmatpush1.msra.mxu0 0.0
    %459 = vmatprep.subr.mxu0 0.0
    %460 = vmatpush1.msra.mxu0 0.0
    %461 = vmatprep.subr.mxu0 0.0
    %462 = vmatpush1.msra.mxu0 %v426
    %463 = vmatprep.subr.mxu0 0.0
    %464 = vmatpush1.msra.mxu0 %v425
    %465 = vmatprep.subr.mxu0 0.0
    %466 = vmatpush1.msra.mxu0 %v424
    %467 = vmatprep.subr.mxu0 0.0
    %468 = vmatpush1.msra.mxu0 %v423
    %469 = vmatprep.subr.mxu0 0.0
    %470 = vmatpush2.msra.mxu0 0.0
    %471 = vmatprep.subr.mxu0 0.0
    %472 = vmatpush2.msra.mxu0 0.0
    %473 = vmatprep.subr.mxu0 0.0
    %474 = vmatpush2.msra.mxu0 0.0
    %475 = vmatprep.subr.mxu0 0.0
    %476 = vmatpush2.msra.mxu0 0.0
    %477 = vmatprep.subr.mxu0 0.0
    %478 = vmatpush2.msra.mxu0 0.0
    %479 = vmatprep.subr.mxu0 0.0
    %480 = vmatpush2.msra.mxu0 0.0
    %481 = vmatprep.subr.mxu0 0.0
    %482 = vmatpush2.msra.mxu0 0.0
    %483 = vmatprep.subr.mxu0 0.0
    %484 = vmatpush2.msra.mxu0 0.0
    %485 = vmatprep.subr.mxu0 0.0
    %486 = vmatpush2.msra.mxu0 0.0
    %487 = vmatprep.subr.mxu0 0.0
    %488 = vmatpush2.msra.mxu0 0.0
    %489 = vmatprep.subr.mxu0 0.0
    %490 = vmatpush2.msra.mxu0 0.0
    %491 = vmatprep.subr.mxu0 0.0
    %492 = vmatpush2.msra.mxu0 0.0
    %493 = vmatprep.subr.mxu0 0.0
    %494 = vmatpush2.msra.mxu0 0.0
    %495 = vmatprep.subr.mxu0 0.0
    %496 = vmatpush2.msra.mxu0 0.0
    %497 = vmatprep.subr.mxu0 0.0
    %498 = vmatpush2.msra.mxu0 0.0
    %499 = vmatprep.subr.mxu0 0.0
    %500 = vmatpush2.msra.mxu0 0.0
    %501 = vmatprep.mubr.f32.mxu0 0.0
    %502 = vmatmul.mubr.f32.gmra.mxu0 %v435
    %v503 = vpop.f32.mrf.mxu0
    %v504 = vadd.f32 %v432, %v503
    %v505 = vpop.f32.mrf.mxu0
    %506 = vdwg.mxu0
    %507 = vst.msk [vmem:[#allocation2] sm:$0xff] %vm100, %v504
    %v508 = vld [vmem:[#allocation2] ss:$8 sm:$0x1]
    %s509 = scalar_lea.vmem [#allocation2], 1
    %v510 = vld [vmem:[%s509] ss:$8 sm:$0x1]
    %s511 = scalar_lea.vmem [#allocation2], 2
    %v512 = vld [vmem:[%s511] ss:$8 sm:$0x1]
    %s513 = scalar_lea.vmem [#allocation2], 3
    %v514 = vld [vmem:[%s513] ss:$8 sm:$0x1]
    %s515 = scalar_lea.vmem [#allocation2], 4
    %v516 = vld [vmem:[%s515] ss:$8 sm:$0x1]
    %s517 = scalar_lea.vmem [#allocation2], 5
    %v518 = vld [vmem:[%s517] ss:$8 sm:$0x1]
    %s519 = scalar_lea.vmem [#allocation2], 6
    %v520 = vld [vmem:[%s519] ss:$8 sm:$0x1]
    %s521 = scalar_lea.vmem [#allocation2], 7
    %v522 = vld [vmem:[%s521] ss:$8 sm:$0x1]
    %524 = vrot.lane.b32.xlu0 %v510, 16
    %v525 = vpop.permute.xlu0 %524
    %528 = vrot.lane.b32.xlu0 %v512, 32
    %v529 = vpop.permute.xlu0 %528
    %532 = vrot.lane.b32.xlu0 %v514, 48
    %v533 = vpop.permute.xlu0 %532
    %536 = vrot.lane.b32.xlu0 %v516, 64
    %v537 = vpop.permute.xlu0 %536
    %540 = vrot.lane.b32.xlu0 %v518, 80
    %v541 = vpop.permute.xlu0 %540
    %544 = vrot.lane.b32.xlu0 %v520, 96
    %v545 = vpop.permute.xlu0 %544
    %548 = vrot.lane.b32.xlu0 %v522, 112
    %v549 = vpop.permute.xlu0 %548
    %v551 = vsel %vm100, %v508, %v525
    %v552 = vsel %vm267, %v551, %v529
    %vm553 = vcmask 392192
    %v554 = vsel %vm553, %v552, %v533
    %vm555 = vcmask 523264
    %v556 = vsel %vm555, %v554, %v537
    %vm557 = vcmask 654336
    %v558 = vsel %vm557, %v556, %v541
    %vm559 = vcmask 785408
    %v560 = vsel %vm559, %v558, %v545
    %vm561 = vcmask 916480
    %v562 = vsel %vm561, %v560, %v549
    %563 = vst [vmem:[#allocation11] sm:$0x1] %v562
    // Predicated region
    $region62: #{tpu_custom_call.1} parent=1 // pred_check
      _
    $region63: #{tpu_custom_call.1} parent=1 // pred_check_branch
      %565 = sbr.rel (0) target = $region65
    $region64: #{tpu_custom_call.1} parent=1 // pred_region
      %s567 = ssub.s32 16, 16
      %568 = vsyncadd [#allocation5], %s567
      %s570 = sshll.u32 [#allocation11], 4
      %s571 = int_to_ptr.vmem [resolvable:$true] %s570
      %573 = dma.vmem_to_hbm [thread:$0]  %s571, 16, %s11, [#allocation5]
    $region65: #{tpu_custom_call.1} parent=1 // pred_fallthru
      _
    // Predicated region
    $region66: #{tpu_custom_call.1} parent=1 // pred_check
      _
    $region67: #{tpu_custom_call.1} parent=1 // pred_check_branch
      %575 = sbr.rel (0) target = $region69
    $region68: #{tpu_custom_call.1} parent=1 // pred_region
      %576 = dma.done [#allocation5], 16
    $region69: #{tpu_custom_call.1} parent=1 // pred_fallthru
      _
    %577 = vsyncpa [#allocation4], 1
    %578 = vsyncpa [#allocation7], 1
    %579 = vsyncpa [#allocation10], 1
    %580 = vsyncpa [#allocation5], 1

</llo_original>
